<compile_context>
chip_gen: v6e
topology: v6e:2x2x1
jax: 0.10.0
libtpu: 0.0.40
codegen_flags: <defaults>
</compile_context>

<pallas_src>
import functools

import jax
import jax.numpy as jnp
from jax import lax
from jax.experimental import pallas as pl
from jax.experimental.pallas import tpu as pltpu

_LANE = 128
_NUM_CORES = 2                          # leading "parallel" axis (v7x: 2 TCs)
_TARGET_BLOCK_BYTES = 6 * 1024 * 1024   # ~6 MiB per input per grid step
_FAST_PATH_MAX_BYTES = 256 * 1024       # below this, plain XLA wins


def _cdiv(a: int, b: int) -> int:
    return -(-a // b)


def _round_up(a: int, b: int) -> int:
    return _cdiv(a, b) * b


def _mse_partial_kernel(x_ref, t_ref, o_ref, *, k_steps, block_rows, chunk,
                        rows_total, needs_mask):
    """Accumulates sum((x - t)^2) of this core's blocks into an (8,128) slab."""
    c = pl.program_id(0)
    k = pl.program_id(1)

    @pl.when(k == 0)
    def _():
        o_ref[...] = jnp.zeros_like(o_ref)

    # Nominal (unclamped) first global row of this block; used by the mask.
    block_start = (c * k_steps + k) * block_rows

    # Chunked accumulate: ~8 vregs per operand per iteration, so the
    # elementwise temporaries never materialize as big VMEM arrays.
    @pl.loop(0, block_rows // chunk)
    def _(ci):
        start = pl.multiple_of(ci * chunk, chunk)
        xd = x_ref[pl.ds(start, chunk), :].astype(jnp.float32)
        td = t_ref[pl.ds(start, chunk), :].astype(jnp.float32)
        d = xd - td
        dd = d * d
        if needs_mask:
            # Zero rows past the end of the real data (ragged last block /
            # clamped empty block).  Row-level mask: n_elems % 128 == 0 on
            # this path, so row granularity is exact.
            row = (block_start + start
                   + lax.broadcasted_iota(jnp.int32, (chunk, 1), 0))
            dd = jnp.where(row < rows_total, dd, 0.0)
        # (chunk,128) -> (chunk//8, 8, 128): tile-aligned regroup, then a pure
        # VPU sum over the leading axis into the resident (8,128) accumulator.
        o_ref[0, :, :] += dd.reshape(chunk // 8, 8, _LANE).sum(axis=0)


def _plain_mse(x: jax.Array, target: jax.Array) -> jax.Array:
    d = x.astype(jnp.float32) - target.astype(jnp.float32)
    return (jnp.sum(d * d) / jnp.float32(x.size)).astype(x.dtype)


def content_loss(x: jax.Array, target: jax.Array) -> jax.Array:
    """Equivalent of F.mse_loss(x, target) with mean reduction."""
    assert x.shape == target.shape, "mse_loss requires matching shapes"
    n_elems = x.size
    itemsize = jnp.dtype(x.dtype).itemsize
    nbytes = n_elems * itemsize

    # dtype-aware packing: rows per packed sublane tile (f32:8, bf16:16, i8:32).
    pack = max(8, 32 // itemsize)
    chunk = 8 * pack                        # rows per inner-loop chunk

    if (nbytes <= _FAST_PATH_MAX_BYTES
            or n_elems % _LANE != 0
            or n_elems // _LANE < _NUM_CORES * chunk):
        # Small inputs: pallas_call launch + grid overhead exceeds the whole op.
        # Non-128-aligned sizes: a zero-copy (rows,128) view is impossible and
        # any pad/slice would re-copy both tensors, which is slower than the
        # fused XLA reduction.
        # TODO(synk): element-masked 1-D kernel path for non-128-aligned sizes.
        return _plain_mse(x, target)

    rows_total = n_elems // _LANE

    # ----- tiling: (block_rows, 128) blocks, ~6 MiB per input per step -----
    row_budget = max(chunk,
                     (_TARGET_BLOCK_BYTES // (_LANE * itemsize)) // chunk * chunk)
    k_steps = _cdiv(rows_total, _NUM_CORES * row_budget)     # steps per core
    block_rows = _round_up(_cdiv(rows_total, _NUM_CORES * k_steps), chunk)
    n_valid_blocks = _cdiv(rows_total, block_rows)
    needs_mask = (_NUM_CORES * k_steps * block_rows) != rows_total

    # Zero-copy views (bitcast reshapes of contiguous data) -- NO padding.
    x2 = x.reshape(rows_total, _LANE)
    t2 = target.reshape(rows_total, _LANE)

    def in_map(c, k):
        # Clamp so a (rare) fully-out-of-range block just re-reads the last
        # valid block; its contribution is zeroed by the in-kernel row mask.
        return (jnp.minimum(c * k_steps + k, n_valid_blocks - 1), 0)

    block_bytes = block_rows * _LANE * itemsize
    # 2 inputs x 2 pipeline buffers + headroom; explicit limit is required on
    # v5e (16 MiB scoped default) and stays under v7x's 64 MiB/TC physical.
    vmem_limit = min(64 * 1024 * 1024,
                     max(32 * 1024 * 1024, 4 * block_bytes + 16 * 1024 * 1024))

    kernel = functools.partial(
        _mse_partial_kernel,
        k_steps=k_steps, block_rows=block_rows, chunk=chunk,
        rows_total=rows_total, needs_mask=needs_mask)

    partials = pl.pallas_call(
        kernel,
        out_shape=jax.ShapeDtypeStruct((_NUM_CORES, 8, _LANE), jnp.float32),
        grid_spec=pltpu.PrefetchScalarGridSpec(
            num_scalar_prefetch=0,
            grid=(_NUM_CORES, k_steps),
            in_specs=[
                pl.BlockSpec((block_rows, _LANE), in_map),
                pl.BlockSpec((block_rows, _LANE), in_map),
            ],
            out_specs=pl.BlockSpec((1, 8, _LANE), lambda c, k: (c, 0, 0)),
        ),
        compiler_params=pltpu.CompilerParams(
            dimension_semantics=("parallel", "arbitrary"),
            vmem_limit_bytes=vmem_limit,
        ),
        cost_estimate=pl.CostEstimate(
            flops=3 * n_elems,
            transcendentals=0,
            bytes_accessed=x2.nbytes + t2.nbytes + _NUM_CORES * 8 * _LANE * 4,
        ),
    )(x2, t2)

    # Tiny final reduction (2*8*128 values) + mean in JAX glue.
    return (jnp.sum(partials) / jnp.float32(n_elems)).astype(x.dtype)


class ContentLoss:
    """JAX/Pallas equivalent of the PyTorch ContentLoss module."""

    def __init__(self, target: jax.Array):
        # target.clone().detach().to(device)  ->  just hold the array.
        self.target = jnp.asarray(target)

    def __call__(self, x: jax.Array) -> jax.Array:
        return content_loss(x, self.target)


if __name__ == "__main__":
    key = jax.random.PRNGKey(0)

    def check(shape, k):
        kx, kt = jax.random.split(jax.random.fold_in(k, hash(shape) & 0xFFFF))
        x = jax.random.normal(kx, shape, dtype=jnp.float32)
        t = jax.random.normal(kt, shape, dtype=jnp.float32)
        loss = ContentLoss(t)(x)
        jax.block_until_ready(loss)
        ref = jnp.mean((x - t) ** 2)
        assert jnp.allclose(loss, ref, rtol=1e-5, atol=1e-5), (shape, loss, ref)

    # Small NCHW conv-feature shape from the module spec -> fast path.
    check((2, 4, 16, 16), key)
    # Larger aligned feature map -> Pallas kernel path (no masking).
    check((2, 16, 64, 64), key)
    # Larger feature map whose row count is ragged w.r.t. the block size
    # -> Pallas kernel path with in-kernel tail masking (no padding copies).
    check((2, 5, 112, 128), key)

    print("KERNEL_OK")
</pallas_src>

<mosaic_0001>
module attributes {stable_mosaic.version = 11 : i64} {
  func.func @_mse_partial_kernel(%arg0: i32, %arg1: i32, %arg2: memref<512x128xf32, #tpu.memory_space<vmem>>, %arg3: memref<512x128xf32, #tpu.memory_space<vmem>>, %arg4: memref<1x8x128xf32, #tpu.memory_space<vmem>>) attributes {dimension_semantics = [#tpu.dimension_semantics<parallel>, #tpu.dimension_semantics<arbitrary>], iteration_bounds = array<i64: 2, 1>, scalar_prefetch = 0 : i64, scratch_operands = 0 : i64, tpu.core_type = #tpu.core_type<tc>, window_params = [{transform_indices = @transform_0, window_bounds = array<i64: 512, 128>}, {transform_indices = @transform_1, window_bounds = array<i64: 512, 128>}, {transform_indices = @transform_2, window_bounds = array<i64: 1, 8, 128>}]} {
    %c0_i32 = arith.constant 0 : i32
    %0 = arith.cmpi eq, %arg1, %c0_i32 : i32
    %1 = arith.extui %0 : i1 to i32
    %c0_i32_0 = arith.constant 0 : i32
    %2 = arith.cmpi ne, %1, %c0_i32_0 : i32
    scf.if %2 {
      %cst = arith.constant 0.000000e+00 : f32
      %4 = vector.broadcast %cst : f32 to vector<1x8x128xf32>
      %c0 = arith.constant 0 : index
      %c0_3 = arith.constant 0 : index
      %c0_4 = arith.constant 0 : index
      %5 = vector.load %arg4[%c0, %c0_3, %c0_4] : memref<1x8x128xf32, #tpu.memory_space<vmem>>, vector<1x8x128xf32>
      tpu.vector_store %arg4[%c0, %c0_3, %c0_4], %4 {strides = array<i32>} : memref<1x8x128xf32, #tpu.memory_space<vmem>>, vector<1x8x128xf32>,
    } else {
    }
    %c0_i32_1 = arith.constant 0 : i32
    %c8_i32 = arith.constant 8 : i32
    %3 = arith.addi %c0_i32_1, %c8_i32 : i32
    %c1_i32 = arith.constant 1 : i32
    scf.for %arg5 = %c0_i32_1 to %3 step %c1_i32  : i32 {
      %c1_i32_3 = arith.constant 1 : i32
      %4 = arith.muli %arg5, %c1_i32_3 : i32
      %c0_i32_4 = arith.constant 0 : i32
      %5 = arith.addi %c0_i32_4, %4 : i32
      %c64_i32 = arith.constant 64 : i32
      %6 = arith.muli %5, %c64_i32 : i32
      %7 = tpu.assume_multiple %6, 64 : i32
      %8 = arith.index_cast %7 : i32 to index
      %c0 = arith.constant 0 : index
      %9 = vector.load %arg2[%8, %c0] : memref<512x128xf32, #tpu.memory_space<vmem>>, vector<64x128xf32>
      %10 = arith.index_cast %7 : i32 to index
      %c0_5 = arith.constant 0 : index
      %11 = vector.load %arg3[%10, %c0_5] : memref<512x128xf32, #tpu.memory_space<vmem>>, vector<64x128xf32>
      %12 = arith.subf %9, %11 : vector<64x128xf32>
      %13 = arith.mulf %12, %12 : vector<64x128xf32>
      %c0_6 = arith.constant 0 : index
      %c0_7 = arith.constant 0 : index
      %c0_8 = arith.constant 0 : index
      %14 = vector.load %arg4[%c0_6, %c0_7, %c0_8] : memref<1x8x128xf32, #tpu.memory_space<vmem>>, vector<1x8x128xf32>
      %15 = vector.shape_cast %14 : vector<1x8x128xf32> to vector<8x128xf32>
      %16 = vector.shape_cast %13 : vector<64x128xf32> to vector<8x8x128xf32>
      %cst = arith.constant dense<0.000000e+00> : vector<8x128xf32>
      %17 = vector.multi_reduction <add>, %16, %cst [0] : vector<8x8x128xf32> to vector<8x128xf32>
      %18 = arith.addf %15, %17 : vector<8x128xf32>
      %c0_9 = arith.constant 0 : index
      %c0_10 = arith.constant 0 : index
      %c0_11 = arith.constant 0 : index
      %19 = vector.load %arg4[%c0_9, %c0_10, %c0_11] : memref<1x8x128xf32, #tpu.memory_space<vmem>>, vector<1x8x128xf32>
      %20 = vector.shape_cast %19 : vector<1x8x128xf32> to vector<8x128xf32>
      %21 = vector.shape_cast %18 : vector<8x128xf32> to vector<1x8x128xf32>
      tpu.vector_store %arg4[%c0_9, %c0_10, %c0_11], %21 {strides = array<i32>} : memref<1x8x128xf32, #tpu.memory_space<vmem>>, vector<1x8x128xf32>,
    }
    %c8_i32_2 = arith.constant 8 : i32
    return
  }
  func.func @transform_0(%arg0: i32, %arg1: i32) -> (i32, i32) {
    %c1_i32 = arith.constant 1 : i32
    %0 = arith.muli %arg0, %c1_i32 : i32
    %1 = arith.addi %0, %arg1 : i32
    %c1_i32_0 = arith.constant 1 : i32
    %2 = arith.minsi %1, %c1_i32_0 : i32
    %c0_i32 = arith.constant 0 : i32
    %c0_i32_1 = arith.constant 0 : i32
    return %2, %c0_i32 : i32, i32
  }
  func.func @transform_1(%arg0: i32, %arg1: i32) -> (i32, i32) {
    %c1_i32 = arith.constant 1 : i32
    %0 = arith.muli %arg0, %c1_i32 : i32
    %1 = arith.addi %0, %arg1 : i32
    %c1_i32_0 = arith.constant 1 : i32
    %2 = arith.minsi %1, %c1_i32_0 : i32
    %c0_i32 = arith.constant 0 : i32
    %c0_i32_1 = arith.constant 0 : i32
    return %2, %c0_i32 : i32, i32
  }
  func.func @transform_2(%arg0: i32, %arg1: i32) -> (i32, i32, i32) {
    %c0_i32 = arith.constant 0 : i32
    %c0_i32_0 = arith.constant 0 : i32
    %c0_i32_1 = arith.constant 0 : i32
    return %arg0, %c0_i32, %c0_i32_0 : i32, i32, i32
  }
}

</mosaic_0001>

<llo_original>
// kernel: tpu_custom_call.1
$region0: #{tpu_custom_call.1}
  #allocation0 [shape = 'u32[]', space=smem, size = 0x4, offset = 0x4, fixed_abs, tag = 'smem constant byte address 0x4 - core index']
  #allocation1 [shape = 'u32[144,128]{1,0:T(1,128)}', space=vmem, size = 0x12000, scoped, tag = 'internal scratch']
  %s0 = inlined_call_operand.hbm [shape: f32[1024,128], index: 0, kind: input, shape index: {}]
  %s1 = inlined_call_operand.hbm [shape: f32[1024,128], index: 1, kind: input, shape index: {}]
  %s2 = inlined_call_operand.hbm [shape: f32[2,8,128], index: 2, kind: output, shape index: {}]
  %s3 = sld [smem:[#allocation0]]
  $region60: #{tpu_custom_call.1} parent=0
    _
  %s5 = ssub.s32 1, %s3
  %s6 = scalar_select 0, %s5, %s3
  $region1: #{tpu_custom_call.1} parent=0
    #allocation2 [shape = 'u8[524288]{0}', space=vmem, size = 0x80000, scoped, tag = 'input window, operand 0']
    #allocation3 [shape = 's32[2]{0}', space=sflag, size = 0x8, scoped, tag = 'scoped memory for tpu_custom_call.1']
    #allocation4 [shape = 's32[2]{0}', space=sflag, size = 0x8, scoped, tag = 'scoped memory for tpu_custom_call.1']
    #allocation5 [shape = 'u8[524288]{0}', space=vmem, size = 0x80000, scoped, tag = 'input window, operand 1']
    #allocation6 [shape = 's32[2]{0}', space=sflag, size = 0x8, scoped, tag = 'scoped memory for tpu_custom_call.1']
    #allocation7 [shape = 'u8[8192]{0}', space=vmem, size = 0x2000, scoped, tag = 'output window, operand 0']
    %7 = vsyncpa [#allocation3], 0
    %s8 = scalar_lea.sflag [#allocation3], 1
    %9 = vsyncpa %s8, 0
    %10 = vsyncpa [#allocation6], 0
    %s11 = scalar_lea.sflag [#allocation6], 1
    %12 = vsyncpa %s11, 0
    %13 = vsyncpa [#allocation4], 0
    %s14 = scalar_lea.sflag [#allocation4], 1
    %15 = vsyncpa %s14, 0
    loop: start=0, step=1, limit=4
    $region2: #{tpu_custom_call.1} parent=1 // loop_pre_header
      _
    $region3: #{tpu_custom_call.1} parent=1 // loop_header
      %s17 = sphi 0, %s21
      %p18 = scmp.ge.s32.totalorder %s17, 4
      %s24 = sphi 0, %s36
      %s25 = sphi 0, %s32
      %s26 = sphi 0, %s24
      %s27 = sphi 0, %s25
      %s28 = sphi 0, %s26
      %s29 = sphi 0, %s27
      %s45 = sphi 0, %s47
      %s48 = sphi 0, %s45
      %s49 = sphi 0, %s48
      %s65 = sphi 0, %s49
      %s77 = sphi 0, %s79
      %s80 = sphi 0, %s77
      %s81 = sphi 0, %s80
      %s97 = sphi 0, %s81
      %s103 = sphi 0, %s105
      %s106 = sphi 0, %s103
      %s107 = sphi 0, %s106
      %s123 = sphi 0, %s107
    $region4: #{tpu_custom_call.1} parent=1 // loop_header_branch
      %20 = sbr.rel (%p18) target = $region8
    $region5: #{tpu_custom_call.1} parent=1 // loop_body
      %s22 = ssub.s32 %s17, 1
      %s23 = ssub.s32 %s17, 2
      %s30 = sadd.s32 1, %s25
      %p31 = scmp.ge.s32.totalorder %s30, 1
      %s32 = scalar_select %p31, 0, %s30
      %s33 = sadd.s32 1, %s24
      %s34 = scalar_select %p31, %s33, %s24
      %p35 = scmp.ge.s32.totalorder %s34, 2
      %s36 = scalar_select %p35, 0, %s34
      %s37 = sadd.s32 %s24, %s25
      %p38 = scmp.lt.s32.totalorder %s37, 1
      %s39 = scalar_select %p38, %s37, 1
      %s40 = sadd.s32 %s36, %s32
      %p41 = scmp.lt.s32.totalorder %s40, 1
      %s42 = scalar_select %p41, %s40, 1
      %s43 = ssub.s32 %s39, %s42
      %p44 = scmp.eq.s32.totalorder %s43, 0
      %s46 = sadd.s32 %s45, 1
      %s47 = scalar_select %p44, %s45, %s46
      %p50 = pneg %p44
      %p51 = scmp.eq.s32.totalorder %s17, 1
      %p52 = por %p50, %p51
      %p53 = scmp.ne.s32.totalorder %s45, %s48
      %p54 = scmp.eq.s32.totalorder %s17, 0
      %p55 = por %p53, %p54
      %p56 = scmp.ne.s32.totalorder %s45, %s48
      %p57 = scmp.eq.s32.totalorder %s22, 1
      %p58 = por %p56, %p57
      %p59 = scmp.ne.s32.totalorder %s48, %s49
      %p60 = scmp.eq.s32.totalorder %s22, 0
      %p61 = por %p59, %p60
      %p62 = scmp.ne.s32.totalorder %s48, %s49
      %p63 = scmp.eq.s32.totalorder %s23, 1
      %p64 = por %p62, %p63
      %p66 = scmp.ne.s32.totalorder %s49, %s65
      %p67 = scmp.eq.s32.totalorder %s23, 0
      %p68 = por %p66, %p67
      %s69 = sadd.s32 %s24, %s25
      %p70 = scmp.lt.s32.totalorder %s69, 1
      %s71 = scalar_select %p70, %s69, 1
      %s72 = sadd.s32 %s36, %s32
      %p73 = scmp.lt.s32.totalorder %s72, 1
      %s74 = scalar_select %p73, %s72, 1
      %s75 = ssub.s32 %s71, %s74
      %p76 = scmp.eq.s32.totalorder %s75, 0
      %s78 = sadd.s32 %s77, 1
      %s79 = scalar_select %p76, %s77, %s78
      %p82 = pneg %p76
      %p83 = scmp.eq.s32.totalorder %s17, 1
      %p84 = por %p82, %p83
      %p85 = scmp.ne.s32.totalorder %s77, %s80
      %p86 = scmp.eq.s32.totalorder %s17, 0
      %p87 = por %p85, %p86
      %p88 = scmp.ne.s32.totalorder %s77, %s80
      %p89 = scmp.eq.s32.totalorder %s22, 1
      %p90 = por %p88, %p89
      %p91 = scmp.ne.s32.totalorder %s80, %s81
      %p92 = scmp.eq.s32.totalorder %s22, 0
      %p93 = por %p91, %p92
      %p94 = scmp.ne.s32.totalorder %s80, %s81
      %p95 = scmp.eq.s32.totalorder %s23, 1
      %p96 = por %p94, %p95
      %p98 = scmp.ne.s32.totalorder %s81, %s97
      %p99 = scmp.eq.s32.totalorder %s23, 0
      %p100 = por %p98, %p99
      %s101 = ssub.s32 %s24, %s36
      %p102 = scmp.eq.s32.totalorder %s101, 0
      %s104 = sadd.s32 %s103, 1
      %s105 = scalar_select %p102, %s103, %s104
      %p108 = pneg %p102
      %p109 = scmp.eq.s32.totalorder %s17, 1
      %p110 = por %p108, %p109
      %p111 = scmp.ne.s32.totalorder %s103, %s106
      %p112 = scmp.eq.s32.totalorder %s17, 0
      %p113 = por %p111, %p112
      %p114 = scmp.ne.s32.totalorder %s103, %s106
      %p115 = scmp.eq.s32.totalorder %s22, 1
      %p116 = por %p114, %p115
      %p117 = scmp.ne.s32.totalorder %s106, %s107
      %p118 = scmp.eq.s32.totalorder %s22, 0
      %p119 = por %p117, %p118
      %p120 = scmp.ne.s32.totalorder %s106, %s107
      %p121 = scmp.eq.s32.totalorder %s23, 1
      %p122 = por %p120, %p121
      %p124 = scmp.ne.s32.totalorder %s107, %s123
      %p125 = scmp.eq.s32.totalorder %s23, 0
      %p126 = por %p124, %p125
      %p127 = scmp.le.s32.totalorder 1, %s17
      %p128 = scmp.lt.s32.totalorder %s17, 3
      %p129 = pnand %p127, %p128
      %p130 = pneg %p129
      // Predicated region
      $region9: #{tpu_custom_call.1} parent=5 // pred_check
        _
      $region10: #{tpu_custom_call.1} parent=5 // pred_check_branch
        %132 = sbr.rel (%p129) target = $region12
      $region11: #{tpu_custom_call.1} parent=5 // pred_region
        %s133 = ssub.s32 %s17, 1
      $region12: #{tpu_custom_call.1} parent=5 // pred_fallthru
        _
      %p134 = scmp.lt.s32.totalorder %s17, 2
      // Predicated region
      $region13: #{tpu_custom_call.1} parent=5 // pred_check
        %p135 = pneg %p134
      $region14: #{tpu_custom_call.1} parent=5 // pred_check_branch
        %137 = sbr.rel (%p135) target = $region16
      $region15: #{tpu_custom_call.1} parent=5 // pred_region
        // Predicated region
        $region17: #{tpu_custom_call.1} parent=15 // pred_check
          %p138 = pneg %p55
        $region18: #{tpu_custom_call.1} parent=15 // pred_check_branch
          %140 = sbr.rel (%p138) target = $region20
        $region19: #{tpu_custom_call.1} parent=15 // pred_region
          %s141 = sand.u32 %s45, 1
          %s142 = scalar_lea.sflag [#allocation3], %s141
          %s143 = sand.u32 %s45, 1
          %s144 = smul.addr %s143, 512
          %s145 = scalar_lea.vmem [#allocation2], %s144
          %s146 = sadd.s32 %s24, %s25
          %p147 = scmp.lt.s32.totalorder %s146, 1
          %s148 = scalar_select %p147, %s146, 1
          %s149 = smul.u32 64, %s148
          %s151 = ssub.s32 8192, 8192
          %152 = vsyncadd %s142, %s151
          %s153 = smul.addr %s149, 128
          %s154 = scalar_lea.hbm %s0, %s153
          %s155 = sshll.u32 %s145, 4
          %s156 = int_to_ptr.vmem [resolvable:$true] %s155
          %161 = dma.hbm_to_vmem [thread:$0]  %s154, 8192, %s156, %s142, 128, 128, 8
        $region20: #{tpu_custom_call.1} parent=15 // pred_fallthru
          _
        // Predicated region
        $region21: #{tpu_custom_call.1} parent=15 // pred_check
          %p162 = pneg %p87
        $region22: #{tpu_custom_call.1} parent=15 // pred_check_branch
          %164 = sbr.rel (%p162) target = $region24
        $region23: #{tpu_custom_call.1} parent=15 // pred_region
          %s165 = sand.u32 %s77, 1
          %s166 = scalar_lea.sflag [#allocation6], %s165
          %s167 = sand.u32 %s77, 1
          %s168 = smul.addr %s167, 512
          %s169 = scalar_lea.vmem [#allocation5], %s168
          %s170 = sadd.s32 %s24, %s25
          %p171 = scmp.lt.s32.totalorder %s170, 1
          %s172 = scalar_select %p171, %s170, 1
          %s173 = smul.u32 64, %s172
          %s175 = ssub.s32 8192, 8192
          %176 = vsyncadd %s166, %s175
          %s177 = smul.addr %s173, 128
          %s178 = scalar_lea.hbm %s1, %s177
          %s179 = sshll.u32 %s169, 4
          %s180 = int_to_ptr.vmem [resolvable:$true] %s179
          %185 = dma.hbm_to_vmem [thread:$0]  %s178, 8192, %s180, %s166, 128, 128, 8
        $region24: #{tpu_custom_call.1} parent=15 // pred_fallthru
          _
      $region16: #{tpu_custom_call.1} parent=5 // pred_fallthru
        _
      %p186 = scmp.le.s32.totalorder 1, %s17
      %p187 = scmp.lt.s32.totalorder %s17, 3
      %p188 = pnand %p186, %p187
      %p189 = pneg %p188
      // Predicated region
      $region25: #{tpu_custom_call.1} parent=5 // pred_check
        _
      $region26: #{tpu_custom_call.1} parent=5 // pred_check_branch
        %191 = sbr.rel (%p188) target = $region28
      $region27: #{tpu_custom_call.1} parent=5 // pred_region
        %s192 = ssub.s32 %s17, 1
        %s193 = sand.u32 %s48, 1
        %s194 = scalar_lea.sflag [#allocation3], %s193
        %s195 = sand.u32 %s48, 1
        %s196 = smul.addr %s195, 512
        %s197 = scalar_lea.vmem [#allocation2], %s196
        // Predicated region
        $region29: #{tpu_custom_call.1} parent=27 // pred_check
          %p198 = pneg %p61
        $region30: #{tpu_custom_call.1} parent=27 // pred_check_branch
          %200 = sbr.rel (%p198) target = $region32
        $region31: #{tpu_custom_call.1} parent=27 // pred_region
          %201 = dma.done %s194, 8192
        $region32: #{tpu_custom_call.1} parent=27 // pred_fallthru
          _
        %s202 = sand.u32 %s80, 1
        %s203 = scalar_lea.sflag [#allocation6], %s202
        %s204 = sand.u32 %s80, 1
        %s205 = smul.addr %s204, 512
        %s206 = scalar_lea.vmem [#allocation5], %s205
        // Predicated region
        $region33: #{tpu_custom_call.1} parent=27 // pred_check
          %p207 = pneg %p93
        $region34: #{tpu_custom_call.1} parent=27 // pred_check_branch
          %209 = sbr.rel (%p207) target = $region36
        $region35: #{tpu_custom_call.1} parent=27 // pred_region
          %210 = dma.done %s203, 8192
        $region36: #{tpu_custom_call.1} parent=27 // pred_fallthru
          _
        %s211 = sand.u32 %s48, 1
        %s212 = scalar_lea.sflag [#allocation3], %s211
        %s213 = sand.u32 %s48, 1
        %s214 = smul.addr %s213, 512
        %s215 = scalar_lea.vmem [#allocation2], %s214
        %p216 = pneg %p61
        %p217 = pneg %p58
        %s218 = sand.u32 %s80, 1
        %s219 = scalar_lea.sflag [#allocation6], %s218
        %s220 = sand.u32 %s80, 1
        %s221 = smul.addr %s220, 512
        %s222 = scalar_lea.vmem [#allocation5], %s221
        %p223 = pneg %p93
        %p224 = pneg %p90
        %p225 = pneg %p119
        %p226 = pneg %p116
        %s227 = sand.u32 %s106, 1
        %s228 = scalar_lea.sflag [#allocation4], %s227
        %s229 = sand.u32 %s106, 1
        %s230 = smul.addr %s229, 8
        %s231 = scalar_lea.vmem [#allocation7], %s230
        %s232 = sadd.s32 %s26, %s27
        %p233 = scmp.lt.s32.totalorder %s232, 1
        %s234 = scalar_select %p233, %s232, 1
        %s235 = smul.u32 64, %s234
        %s236 = sadd.s32 %s26, %s27
        %p237 = scmp.lt.s32.totalorder %s236, 1
        %s238 = scalar_select %p237, %s236, 1
        %s239 = smul.u32 64, %s238
        %p240 = scmp.eq.s32.totalorder %s27, 0
        // Predicated region
        $region37: #{tpu_custom_call.1} parent=27 // pred_check
          %p241 = pneg %p240
        $region38: #{tpu_custom_call.1} parent=27 // pred_check_branch
          %243 = sbr.rel (%p241) target = $region40
        $region39: #{tpu_custom_call.1} parent=27 // pred_region
          %244 = vst [vmem:[%s231] sm:$0xff] 0.0
        $region40: #{tpu_custom_call.1} parent=27 // pred_fallthru
          _
        loop: start=0, step=1, limit=8
        $region41: #{tpu_custom_call.1} parent=27 // loop_pre_header
          _
        $region42: #{tpu_custom_call.1} parent=27 // loop_header
          %s246 = sphi 0, %s250
          %p247 = scmp.ge.s32.totalorder %s246, 8
        $region43: #{tpu_custom_call.1} parent=27 // loop_header_branch
          %249 = sbr.rel (%p247) target = $region47
        $region44: #{tpu_custom_call.1} parent=27 // loop_body
          %s251 = smul.u32 %s246, 64
          %s252 = scalar_lea.vmem %s197, %s251 [#allocation2]
          %v253 = vld [vmem:[%s252] sm:$0xff]
          %v254 = vld [vmem:[%s252 + $0x8] sm:$0xff]
          %v255 = vld [vmem:[%s252 + $0x10] sm:$0xff]
          %v256 = vld [vmem:[%s252 + $0x18] sm:$0xff]
          %v257 = vld [vmem:[%s252 + $0x20] sm:$0xff]
          %v258 = vld [vmem:[%s252 + $0x28] sm:$0xff]
          %v259 = vld [vmem:[%s252 + $0x30] sm:$0xff]
          %v260 = vld [vmem:[%s252 + $0x38] sm:$0xff]
          %s261 = scalar_lea.vmem %s206, %s251 [#allocation5]
          %v262 = vld [vmem:[%s261] sm:$0xff]
          %v263 = vld [vmem:[%s261 + $0x8] sm:$0xff]
          %v264 = vld [vmem:[%s261 + $0x10] sm:$0xff]
          %v265 = vld [vmem:[%s261 + $0x18] sm:$0xff]
          %v266 = vld [vmem:[%s261 + $0x20] sm:$0xff]
          %v267 = vld [vmem:[%s261 + $0x28] sm:$0xff]
          %v268 = vld [vmem:[%s261 + $0x30] sm:$0xff]
          %v269 = vld [vmem:[%s261 + $0x38] sm:$0xff]
          %v270 = vsub.f32 %v253, %v262
          %v271 = vsub.f32 %v254, %v263
          %v272 = vsub.f32 %v255, %v264
          %v273 = vsub.f32 %v256, %v265
          %v274 = vsub.f32 %v257, %v266
          %v275 = vsub.f32 %v258, %v267
          %v276 = vsub.f32 %v259, %v268
          %v277 = vsub.f32 %v260, %v269
          %v278 = vmul.f32 %v270, %v270
          %v279 = vmul.f32 %v271, %v271
          %v280 = vmul.f32 %v272, %v272
          %v281 = vmul.f32 %v273, %v273
          %v282 = vmul.f32 %v274, %v274
          %v283 = vmul.f32 %v275, %v275
          %v284 = vmul.f32 %v276, %v276
          %v285 = vmul.f32 %v277, %v277
          %v286 = vld [vmem:[%s231] sm:$0xff]
          %v287 = vadd.f32 %v278, %v279
          %v288 = vadd.f32 %v287, %v280
          %v289 = vadd.f32 %v288, %v281
          %v290 = vadd.f32 %v289, %v282
          %v291 = vadd.f32 %v290, %v283
          %v292 = vadd.f32 %v291, %v284
          %v293 = vadd.f32 %v292, %v285
          %v294 = vadd.f32 %v286, %v293
          %295 = vst [vmem:[%s231] sm:$0xff] %v294
        $region45: #{tpu_custom_call.1} parent=27 // loop_footer
          %s250 = sadd.s32 1, %s246
        $region46: #{tpu_custom_call.1} parent=27 // loop_footer_branch
          %245 = sbr.rel target = $region42
        $region47: #{tpu_custom_call.1} parent=27 // loop_exit
          _
        %s296 = sand.u32 %s106, 1
        %s297 = scalar_lea.sflag [#allocation4], %s296
        %s298 = sand.u32 %s106, 1
        %s299 = smul.addr %s298, 8
        %s300 = scalar_lea.vmem [#allocation7], %s299
        // Predicated region
        $region48: #{tpu_custom_call.1} parent=27 // pred_check
          %p301 = pneg %p116
        $region49: #{tpu_custom_call.1} parent=27 // pred_check_branch
          %303 = sbr.rel (%p301) target = $region51
        $region50: #{tpu_custom_call.1} parent=27 // pred_region
          %s305 = ssub.s32 128, 128
          %306 = vsyncadd %s297, %s305
          %s307 = smul.addr %s26, 128
          %s308 = scalar_lea.hbm %s2, %s307
          %s310 = sshll.u32 %s300, 4
          %s311 = int_to_ptr.vmem [resolvable:$true] %s310
          %313 = dma.vmem_to_hbm [thread:$0]  %s311, 128, %s308, %s297
        $region51: #{tpu_custom_call.1} parent=27 // pred_fallthru
          _
      $region28: #{tpu_custom_call.1} parent=5 // pred_fallthru
        _
      %p314 = scmp.le.s32.totalorder 2, %s17
      // Predicated region
      $region52: #{tpu_custom_call.1} parent=5 // pred_check
        %p315 = pneg %p314
      $region53: #{tpu_custom_call.1} parent=5 // pred_check_branch
        %317 = sbr.rel (%p315) target = $region55
      $region54: #{tpu_custom_call.1} parent=5 // pred_region
        %s318 = ssub.s32 %s17, 2
        // Predicated region
        $region56: #{tpu_custom_call.1} parent=54 // pred_check
          %p319 = pneg %p122
        $region57: #{tpu_custom_call.1} parent=54 // pred_check_branch
          %321 = sbr.rel (%p319) target = $region59
        $region58: #{tpu_custom_call.1} parent=54 // pred_region
          %s322 = sand.u32 %s107, 1
          %s323 = scalar_lea.sflag [#allocation4], %s322
          %s324 = sand.u32 %s107, 1
          %s325 = smul.addr %s324, 8
          %s326 = scalar_lea.vmem [#allocation7], %s325
          %327 = dma.done %s323, 128
        $region59: #{tpu_custom_call.1} parent=54 // pred_fallthru
          _
      $region55: #{tpu_custom_call.1} parent=5 // pred_fallthru
        _
    $region6: #{tpu_custom_call.1} parent=1 // loop_footer
      %s21 = sadd.s32 1, %s17
    $region7: #{tpu_custom_call.1} parent=1 // loop_footer_branch
      %16 = sbr.rel target = $region3
    $region8: #{tpu_custom_call.1} parent=1 // loop_exit
      _
    %328 = vsyncpa [#allocation3], 1
    %s329 = scalar_lea.sflag [#allocation3], 1
    %330 = vsyncpa %s329, 1
    %331 = vsyncpa [#allocation6], 1
    %s332 = scalar_lea.sflag [#allocation6], 1
    %333 = vsyncpa %s332, 1
    %334 = vsyncpa [#allocation4], 1
    %s335 = scalar_lea.sflag [#allocation4], 1
    %336 = vsyncpa %s335, 1

</llo_original>
